<compile_context>
chip_gen: v5e
topology: v5e:2x2
jax: 0.10.0
libtpu: 0.0.40
codegen_flags: <defaults>
</compile_context>

<pallas_src>
import jax
import jax.numpy as jnp
from jax import lax
from jax.experimental import pallas as pl
from jax.experimental.pallas import tpu as pltpu


# -----------------------------------------------------------------------------
# Pallas kernel: CAM head (logits + ReLU CAMs)
# -----------------------------------------------------------------------------
def cam_head_kernel(feat_ref, w_ref, logits_ref, cams_ref):
    # feat_ref:   (NB, C, HW)  bf16   stage4 features, HW (lane-dense) last
    # w_ref:      (K, C)       bf16   classifier weight (1x1 conv, no bias)
    # logits_ref: (NB, K)      f32
    # cams_ref:   (NB, K, HW)  f32    relu(conv1x1(feature)), HW lane-dense
    nb = cams_ref.shape[0]
    hw = cams_ref.shape[-1]
    inv_hw = jnp.float32(1.0 / hw)

    w = w_ref[...]                                            # (K, C)

    logit_rows = []
    for n in range(nb):  # nb is a small static block size -> unrolled at trace
        feat_n = feat_ref[n]                                  # (C, HW)
        # 1x1 conv over channels == (K,C) @ (C,HW): standard MXU contraction,
        # f32 accumulation, lane-dense (HW) result.
        cams_raw = jnp.dot(w, feat_n,
                           preferred_element_type=jnp.float32)  # (K, HW) f32
        cams_ref[n] = jnp.maximum(cams_raw, 0.0)              # ReLU, unmasked store
        # logits = classifier(gap2d(feature)); the 1x1 conv is linear and
        # bias-free, so this equals the spatial mean of the pre-ReLU cams
        # (a lane-axis reduction on the XLU).
        logit_rows.append((jnp.sum(cams_raw, axis=-1) * inv_hw)[None, :])  # (1, K)
    logits_ref[...] = jnp.concatenate(logit_rows, axis=0)     # (NB, K)


def cam_head_pallas(feature_nchw, w_oihw, *, n_block=None,
                    compute_dtype=jnp.bfloat16):
    """CAM head of Net_CAM.

    feature_nchw: (N, C, H, W) f32 stage4 feature map
    w_oihw:       (K, C, 1, 1) f32 classifier weight (1x1 conv, no bias)
    returns: logits (N, K) f32, cams (N, K, H, W) f32
    """
    N, C, H, W = feature_nchw.shape
    K = w_oihw.shape[0]
    HW = H * W

    # (N, C, H, W) -> (N, C, HW) is a free reshape (no transpose): channels on
    # sublanes, spatial positions on lanes -- matches the (K, HW) cams layout.
    feat = feature_nchw.reshape(N, C, HW).astype(compute_dtype)
    w_kc = w_oihw.reshape(K, C).astype(compute_dtype)

    in_bytes = jnp.dtype(compute_dtype).itemsize
    per_image_bytes = C * HW * in_bytes

    # Batch fusion: at small scale fuse the whole batch into one grid step
    # (amortizes ~0.35us/step overhead); at real ResNet-50 scale keep one
    # image per step so double-buffered blocks stay well inside VMEM.
    if n_block is None:
        n_block = N if (per_image_bytes * N) <= (2 << 20) else 1
        while N % n_block:
            n_block -= 1
    nb = n_block
    assert N % nb == 0

    # Scoped-VMEM budget: double-buffered feature + cams + logits blocks, the
    # (small) weight, plus headroom.  Matters on v5e (16 MiB default scoped
    # VMEM) at full ResNet-50 feature sizes; capped well under v7x's 64 MiB.
    feat_blk = nb * per_image_bytes
    cams_blk = nb * K * HW * 4
    logits_blk = nb * K * 4
    vmem_need = 2 * (feat_blk + cams_blk + logits_blk) + 2 * K * C * in_bytes
    vmem_limit = int(min(max(vmem_need + (2 << 20), 16 << 20), 48 << 20))

    logits, cams_nk_hw = pl.pallas_call(
        cam_head_kernel,
        out_shape=(
            jax.ShapeDtypeStruct((N, K), jnp.float32),
            jax.ShapeDtypeStruct((N, K, HW), jnp.float32),
        ),
        grid_spec=pltpu.PrefetchScalarGridSpec(
            num_scalar_prefetch=0,
            grid=(N // nb,),
            in_specs=[
                pl.BlockSpec((nb, C, HW), lambda i: (i, 0, 0)),
                pl.BlockSpec((K, C), lambda i: (0, 0)),
            ],
            out_specs=[
                pl.BlockSpec((nb, K), lambda i: (i, 0)),
                pl.BlockSpec((nb, K, HW), lambda i: (i, 0, 0)),
            ],
        ),
        compiler_params=pltpu.CompilerParams(
            dimension_semantics=("parallel",),
            vmem_limit_bytes=vmem_limit,
        ),
    )(feat, w_kc)

    # (N, K, HW) -> (N, K, H, W) is a free reshape; no output transpose needed.
    cams = cams_nk_hw.reshape(N, K, H, W)
    return logits, cams


# -----------------------------------------------------------------------------
# Deterministic scaled-down backbone stand-in (plain JAX glue, NCHW)
# -----------------------------------------------------------------------------
def conv2d_nchw(x, w, stride, padding):
    return lax.conv_general_dilated(
        x, w, window_strides=(stride, stride), padding=padding,
        dimension_numbers=("NCHW", "OIHW", "NCHW"))


def maxpool_3x3_s2(x):
    return lax.reduce_window(
        x, -jnp.inf, lax.max,
        window_dimensions=(1, 1, 3, 3),
        window_strides=(1, 1, 2, 2),
        padding=[(0, 0), (0, 0), (1, 1), (1, 1)])


def make_backbone_params(key, c_feat):
    # scaled-down channel plan (ResNet-50 / 16): 3->16->32->64->128->c_feat
    shapes = {
        "conv1": (16, 3, 7, 7),         # stride 2
        "stage1": (32, 16, 3, 3),       # stride 1
        "stage2": (64, 32, 3, 3),       # stride 2
        "stage3": (128, 64, 3, 3),      # stride 2
        "stage4": (c_feat, 128, 3, 3),  # stride 1 (stride=16 config)
    }
    params = {}
    for name, shp in shapes.items():
        key, sub = jax.random.split(key)
        fan_in = shp[1] * shp[2] * shp[3]
        params[name] = (jax.random.normal(sub, shp, jnp.float32)
                        * (2.0 / fan_in) ** 0.5)
    return params, key


def backbone_forward(params, x):
    # conv1 + relu + maxpool   (/4)
    x = jnp.maximum(conv2d_nchw(x, params["conv1"], 2, [(3, 3), (3, 3)]), 0.0)
    x = maxpool_3x3_s2(x)
    # stage1..stage4           (/4 more -> /16 total)
    x = jnp.maximum(conv2d_nchw(x, params["stage1"], 1, [(1, 1), (1, 1)]), 0.0)
    x = jnp.maximum(conv2d_nchw(x, params["stage2"], 2, [(1, 1), (1, 1)]), 0.0)
    x = jnp.maximum(conv2d_nchw(x, params["stage3"], 2, [(1, 1), (1, 1)]), 0.0)
    x = jnp.maximum(conv2d_nchw(x, params["stage4"], 1, [(1, 1), (1, 1)]), 0.0)
    return x  # (N, c_feat, H/16, W/16)


def net_cam_forward(params, cls_w, x):
    """Net_CAM.forward: returns (logits, cams, feature)."""
    feature = backbone_forward(params, x)
    logits, cams = cam_head_pallas(feature, cls_w)
    return logits, cams, feature


# -----------------------------------------------------------------------------
# Pure-JAX f32 reference of the Net_CAM head (for correctness check)
# -----------------------------------------------------------------------------
def net_cam_head_ref(feature_nchw, w_oihw):
    N, C, H, W = feature_nchw.shape
    K = w_oihw.shape[0]
    wm = w_oihw.reshape(K, C)
    gap = feature_nchw.mean(axis=(2, 3))                     # (N, C)
    logits = gap @ wm.T                                      # (N, K)
    cams = jnp.einsum("nchw,kc->nkhw", feature_nchw, wm)
    cams = jnp.maximum(cams, 0.0)
    return logits, cams


if __name__ == "__main__":
    N_CLASSES = 20
    C_FEAT = 128          # stands in for 2048 in full-size ResNet-50
    N, H_IN, W_IN = 2, 64, 64

    key = jax.random.PRNGKey(0)
    params, key = make_backbone_params(key, C_FEAT)
    key, kx, kw = jax.random.split(key, 3)

    x = jax.random.normal(kx, (N, 3, H_IN, W_IN), jnp.float32)
    # classifier: nn.Conv2d(2048, n_classes, 1, bias=False) -> (K, C, 1, 1)
    cls_w = jax.random.normal(kw, (N_CLASSES, C_FEAT, 1, 1), jnp.float32) * 0.05

    # forward (Net_CAM.forward): returns (logits, cams, feature)
    logits, cams, feature = net_cam_forward(params, cls_w, x)
    jax.block_until_ready((logits, cams, feature))

    # correctness vs pure-JAX f32 reference (kernel uses bf16 inputs with f32
    # accumulation -> scale-relative tolerance instead of 1e-4 allclose)
    r_logits, r_cams = net_cam_head_ref(feature, cls_w)

    def rel_err(a, b):
        scale = jnp.maximum(jnp.max(jnp.abs(b)), 1e-3)
        return float(jnp.max(jnp.abs(a - b)) / scale)

    assert logits.shape == (N, N_CLASSES)
    assert cams.shape == (N, N_CLASSES, 4, 4)
    assert feature.shape == (N, C_FEAT, 4, 4)
    assert rel_err(logits, r_logits) < 2e-2, rel_err(logits, r_logits)
    assert rel_err(cams, r_cams) < 2e-2, rel_err(cams, r_cams)

    print("KERNEL_OK")
</pallas_src>

<mosaic_0001>
module attributes {stable_mosaic.version = 11 : i64} {
  func.func @cam_head_kernel(%arg0: i32, %arg1: memref<2x128x16xbf16, #tpu.memory_space<vmem>>, %arg2: memref<20x128xbf16, #tpu.memory_space<vmem>>, %arg3: memref<2x20xf32, #tpu.memory_space<vmem>>, %arg4: memref<2x20x16xf32, #tpu.memory_space<vmem>>) attributes {dimension_semantics = [#tpu.dimension_semantics<parallel>], iteration_bounds = array<i64: 1>, scalar_prefetch = 0 : i64, scratch_operands = 0 : i64, tpu.core_type = #tpu.core_type<tc>, window_params = [{transform_indices = @transform_0, window_bounds = array<i64: 2, 128, 16>}, {pipeline_mode = #tpu.pipeline_mode<synchronous>, transform_indices = @transform_1, window_bounds = array<i64: 20, 128>}, {transform_indices = @transform_2, window_bounds = array<i64: 2, 20>}, {transform_indices = @transform_3, window_bounds = array<i64: 2, 20, 16>}]} {
    %c0 = arith.constant 0 : index
    %c0_0 = arith.constant 0 : index
    %0 = vector.load %arg2[%c0, %c0_0] : memref<20x128xbf16, #tpu.memory_space<vmem>>, vector<20x128xbf16>
    %c0_1 = arith.constant 0 : index
    %c0_2 = arith.constant 0 : index
    %c0_3 = arith.constant 0 : index
    %1 = vector.load %arg1[%c0_1, %c0_2, %c0_3] : memref<2x128x16xbf16, #tpu.memory_space<vmem>>, vector<1x128x16xbf16>
    %2 = vector.shape_cast %1 : vector<1x128x16xbf16> to vector<128x16xbf16>
    %cst = arith.constant dense<0.000000e+00> : vector<20x16xf32>
    %3 = tpu.matmul %0, %2, %cst {dimension_numbers = #tpu.dot_dimension_numbers<[1], [0], [0], [1], [0, 0, 1, 1], [], []>} : vector<20x128xbf16>, vector<128x16xbf16>, vector<20x16xf32> -> vector<20x16xf32>
    %cst_4 = arith.constant 0.000000e+00 : f32
    %4 = vector.broadcast %cst_4 : f32 to vector<20x16xf32>
    %5 = arith.maximumf %3, %4 : vector<20x16xf32>
    %c0_5 = arith.constant 0 : index
    %c0_6 = arith.constant 0 : index
    %c0_7 = arith.constant 0 : index
    %6 = vector.load %arg4[%c0_5, %c0_6, %c0_7] : memref<2x20x16xf32, #tpu.memory_space<vmem>>, vector<1x20x16xf32>
    %7 = vector.shape_cast %6 : vector<1x20x16xf32> to vector<20x16xf32>
    %8 = vector.shape_cast %5 : vector<20x16xf32> to vector<1x20x16xf32>
    tpu.vector_store %arg4[%c0_5, %c0_6, %c0_7], %8 {strides = array<i32>} : memref<2x20x16xf32, #tpu.memory_space<vmem>>, vector<1x20x16xf32>,
    %cst_8 = arith.constant dense<0.000000e+00> : vector<20xf32>
    %9 = vector.multi_reduction <add>, %3, %cst_8 [1] : vector<20x16xf32> to vector<20xf32>
    %cst_9 = arith.constant 6.250000e-02 : f32
    %10 = vector.broadcast %cst_9 : f32 to vector<20xf32>
    %11 = arith.mulf %9, %10 : vector<20xf32>
    %12 = vector.shape_cast %11 : vector<20xf32> to vector<1x20xf32>
    %c1 = arith.constant 1 : index
    %c0_10 = arith.constant 0 : index
    %c0_11 = arith.constant 0 : index
    %13 = vector.load %arg1[%c1, %c0_10, %c0_11] : memref<2x128x16xbf16, #tpu.memory_space<vmem>>, vector<1x128x16xbf16>
    %14 = vector.shape_cast %13 : vector<1x128x16xbf16> to vector<128x16xbf16>
    %cst_12 = arith.constant dense<0.000000e+00> : vector<20x16xf32>
    %15 = tpu.matmul %0, %14, %cst_12 {dimension_numbers = #tpu.dot_dimension_numbers<[1], [0], [0], [1], [0, 0, 1, 1], [], []>} : vector<20x128xbf16>, vector<128x16xbf16>, vector<20x16xf32> -> vector<20x16xf32>
    %cst_13 = arith.constant 0.000000e+00 : f32
    %16 = vector.broadcast %cst_13 : f32 to vector<20x16xf32>
    %17 = arith.maximumf %15, %16 : vector<20x16xf32>
    %c1_14 = arith.constant 1 : index
    %c0_15 = arith.constant 0 : index
    %c0_16 = arith.constant 0 : index
    %18 = vector.load %arg4[%c1_14, %c0_15, %c0_16] : memref<2x20x16xf32, #tpu.memory_space<vmem>>, vector<1x20x16xf32>
    %19 = vector.shape_cast %18 : vector<1x20x16xf32> to vector<20x16xf32>
    %20 = vector.shape_cast %17 : vector<20x16xf32> to vector<1x20x16xf32>
    tpu.vector_store %arg4[%c1_14, %c0_15, %c0_16], %20 {strides = array<i32>} : memref<2x20x16xf32, #tpu.memory_space<vmem>>, vector<1x20x16xf32>,
    %cst_17 = arith.constant dense<0.000000e+00> : vector<20xf32>
    %21 = vector.multi_reduction <add>, %15, %cst_17 [1] : vector<20x16xf32> to vector<20xf32>
    %cst_18 = arith.constant 6.250000e-02 : f32
    %22 = vector.broadcast %cst_18 : f32 to vector<20xf32>
    %23 = arith.mulf %21, %22 : vector<20xf32>
    %24 = vector.shape_cast %23 : vector<20xf32> to vector<1x20xf32>
    %25 = tpu.concatenate %12, %24 in 0 : vector<1x20xf32>, vector<1x20xf32> -> vector<2x20xf32>
    %c0_19 = arith.constant 0 : index
    %c0_20 = arith.constant 0 : index
    %26 = vector.load %arg3[%c0_19, %c0_20] : memref<2x20xf32, #tpu.memory_space<vmem>>, vector<2x20xf32>
    tpu.vector_store %arg3[%c0_19, %c0_20], %25 {strides = array<i32>} : memref<2x20xf32, #tpu.memory_space<vmem>>, vector<2x20xf32>,
    return
  }
  func.func @transform_0(%arg0: i32) -> (i32, i32, i32) {
    %c0_i32 = arith.constant 0 : i32
    %c0_i32_0 = arith.constant 0 : i32
    %c0_i32_1 = arith.constant 0 : i32
    return %arg0, %c0_i32, %c0_i32_0 : i32, i32, i32
  }
  func.func @transform_1(%arg0: i32) -> (i32, i32) {
    %c0_i32 = arith.constant 0 : i32
    %c0_i32_0 = arith.constant 0 : i32
    %c0_i32_1 = arith.constant 0 : i32
    return %c0_i32, %c0_i32_0 : i32, i32
  }
  func.func @transform_2(%arg0: i32) -> (i32, i32) {
    %c0_i32 = arith.constant 0 : i32
    %c0_i32_0 = arith.constant 0 : i32
    return %arg0, %c0_i32 : i32, i32
  }
  func.func @transform_3(%arg0: i32) -> (i32, i32, i32) {
    %c0_i32 = arith.constant 0 : i32
    %c0_i32_0 = arith.constant 0 : i32
    %c0_i32_1 = arith.constant 0 : i32
    return %arg0, %c0_i32, %c0_i32_0 : i32, i32, i32
  }
}

</mosaic_0001>

<llo_original>
// kernel: tpu_custom_call.1
$region0: #{tpu_custom_call.1}
  #allocation0 [shape = 'u32[]', space=smem, size = 0x4, offset = 0x4, fixed_abs, tag = 'smem constant byte address 0x4 - core index']
  #allocation1 [shape = 'u32[72,128]{1,0:T(1,128)}', space=vmem, size = 0x9000, scoped, tag = 'internal scratch']
  %s0 = inlined_call_operand.vmem [shape: bf16[2,128,16], index: 0, kind: input, shape index: {}]
  %s1 = inlined_call_operand.vmem [shape: bf16[20,128], index: 1, kind: input, shape index: {}]
  %s2 = inlined_call_operand.hbm [shape: f32[2,20], index: 2, kind: output, shape index: {0}]
  %s3 = inlined_call_operand.vmem [shape: f32[2,20,16], index: 3, kind: output, shape index: {1}]
  %4 = xla_tuple %s2, %s3
  %s5 = sld [smem:[#allocation0]]
  $region26: #{tpu_custom_call.1} parent=0
    _
  %s7 = ssub.s32 1, %s5
  %s8 = scalar_select 0, %s7, %s5
  $region1: #{tpu_custom_call.1} parent=0
    #allocation2 [shape = 'u8[1024]{0}', space=vmem, size = 0x400, scoped, tag = 'output window, operand 0, single buffered']
    #allocation3 [shape = 's32[1]{0}', space=sflag, size = 0x4, scoped, tag = 'scoped memory for tpu_custom_call.1']
    %9 = vsyncpa [#allocation3], 0
    // Predicated region
    $region2: #{tpu_custom_call.1} parent=1 // pred_check
      _
    $region3: #{tpu_custom_call.1} parent=1 // pred_check_branch
      %11 = sbr.rel (0) target = $region5
    $region4: #{tpu_custom_call.1} parent=1 // pred_region
      _
    $region5: #{tpu_custom_call.1} parent=1 // pred_fallthru
      _
    // Predicated region
    $region6: #{tpu_custom_call.1} parent=1 // pred_check
      _
    $region7: #{tpu_custom_call.1} parent=1 // pred_check_branch
      %13 = sbr.rel (0) target = $region9
    $region8: #{tpu_custom_call.1} parent=1 // pred_region
      _
    $region9: #{tpu_custom_call.1} parent=1 // pred_fallthru
      _
    %v14 = vld [vmem:[%s1] sm:$0xf]
    %v15 = vld [vmem:[%s1 + $0x4] sm:$0xf]
    %v16 = vld [vmem:[%s1 + $0x8] sm:$0x3]
    %v17 = vld [vmem:[%s0] sm:$0xf]
    %v18 = vld [vmem:[%s0 + $0x4] sm:$0xf]
    %v19 = vld [vmem:[%s0 + $0x8] sm:$0xf]
    %v20 = vld [vmem:[%s0 + $0xc] sm:$0xf]
    %v21 = vld [vmem:[%s0 + $0x10] sm:$0xf]
    %v22 = vld [vmem:[%s0 + $0x14] sm:$0xf]
    %v23 = vld [vmem:[%s0 + $0x18] sm:$0xf]
    %v24 = vld [vmem:[%s0 + $0x1c] sm:$0xf]
    %v25 = vld [vmem:[%s0 + $0x20] sm:$0xf]
    %v26 = vld [vmem:[%s0 + $0x24] sm:$0xf]
    %v27 = vld [vmem:[%s0 + $0x28] sm:$0xf]
    %v28 = vld [vmem:[%s0 + $0x2c] sm:$0xf]
    %v29 = vld [vmem:[%s0 + $0x30] sm:$0xf]
    %v30 = vld [vmem:[%s0 + $0x34] sm:$0xf]
    %v31 = vld [vmem:[%s0 + $0x38] sm:$0xf]
    %v32 = vld [vmem:[%s0 + $0x3c] sm:$0xf]
    %v36 = vunpack.c.l.b16 %v14
    %v37 = vunpack.c.l.b16 %v15
    %v38 = vunpack.c.l.b16 %v16
    %v39 = vpack.c.b16 %v37, %v36
    %v40 = vpack.c.b16 %v38, %v38
    %v59 = vunpack.c.l.b16 %v17
    %v60 = vunpack.c.l.b16 %v18
    %v61 = vunpack.c.l.b16 %v19
    %v62 = vunpack.c.l.b16 %v20
    %v63 = vunpack.c.l.b16 %v21
    %v64 = vunpack.c.l.b16 %v22
    %v65 = vunpack.c.l.b16 %v23
    %v66 = vunpack.c.l.b16 %v24
    %v67 = vunpack.c.l.b16 %v25
    %v68 = vunpack.c.l.b16 %v26
    %v69 = vunpack.c.l.b16 %v27
    %v70 = vunpack.c.l.b16 %v28
    %v71 = vunpack.c.l.b16 %v29
    %v72 = vunpack.c.l.b16 %v30
    %v73 = vunpack.c.l.b16 %v31
    %v74 = vunpack.c.l.b16 %v32
    %v75 = vpack.c.b16 %v60, %v59
    %v76 = vpack.c.b16 %v62, %v61
    %v77 = vpack.c.b16 %v64, %v63
    %v78 = vpack.c.b16 %v66, %v65
    %v79 = vpack.c.b16 %v68, %v67
    %v80 = vpack.c.b16 %v70, %v69
    %v81 = vpack.c.b16 %v72, %v71
    %v82 = vpack.c.b16 %v74, %v73
    %91 = vmatpush.bf16.msra.mxu0 %v82
    %92 = vmatpush.bf16.msra.mxu0 %v81
    %93 = vmatpush.bf16.msra.mxu0 %v80
    %94 = vmatpush.bf16.msra.mxu0 %v79
    %95 = vmatpush.bf16.msra.mxu0 %v78
    %96 = vmatpush.bf16.msra.mxu0 %v77
    %97 = vmatpush.bf16.msra.mxu0 %v76
    %98 = vmatpush.bf16.msra.mxu0 %v75
    %99 = vmatmul.bf16.gmra.mxu0 %v39
    %v100 = vpop.f32.mrf.mxu0
    %v101 = vadd.f32 0.0, %v100
    %v102 = vpop.f32.mrf.mxu0
    %v103 = vadd.f32 0.0, %v102
    %104 = vmatmul.bf16.gmra.mxu0 %v40
    %v105 = vpop.f32.mrf.mxu0
    %v106 = vadd.f32 0.0, %v105
    %v107 = vpop.f32.mrf.mxu0
    %108 = vdwg.mxu0
    %v109 = vmax.f32 %v101, 0.0
    %v110 = vmax.f32 %v103, 0.0
    %v111 = vmax.f32 %v106, 0.0
    %vm112 = vcmask 130048
    %113 = vst.msk [vmem:[%s3] sm:$0xff] %vm112, %v109
    %114 = vst.msk [vmem:[%s3 + $0x8] sm:$0xff] %vm112, %v110
    %vm115 = vcmask 125952
    %116 = vst.msk [vmem:[%s3 + $0x10] sm:$0xf] %vm115, %v111
    %v117 = vsel %vm112, %v101, 0.0
    %118 = vadd.xlane.f32.xlu0 %v117
    %v119 = vpop.xlane.xlu0 %118
    %v120 = vsel %vm112, %v103, 0.0
    %121 = vadd.xlane.f32.xlu0 %v120
    %v122 = vpop.xlane.xlu0 %121
    %v123 = vsel %vm115, %v106, 0.0
    %124 = vadd.xlane.f32.xlu0 %v123
    %v125 = vpop.xlane.xlu0 %124
    %v126 = vmul.f32 %v119, 0.0625
    %v127 = vmul.f32 %v122, 0.0625
    %v128 = vmul.f32 %v125, 0.0625
    %s129 = scalar_lea.vmem %s0, 64
    %v130 = vld [vmem:[%s129] sm:$0xf]
    %v131 = vld [vmem:[%s129 + $0x4] sm:$0xf]
    %v132 = vld [vmem:[%s129 + $0x8] sm:$0xf]
    %v133 = vld [vmem:[%s129 + $0xc] sm:$0xf]
    %v134 = vld [vmem:[%s129 + $0x10] sm:$0xf]
    %v135 = vld [vmem:[%s129 + $0x14] sm:$0xf]
    %v136 = vld [vmem:[%s129 + $0x18] sm:$0xf]
    %v137 = vld [vmem:[%s129 + $0x1c] sm:$0xf]
    %v138 = vld [vmem:[%s129 + $0x20] sm:$0xf]
    %v139 = vld [vmem:[%s129 + $0x24] sm:$0xf]
    %v140 = vld [vmem:[%s129 + $0x28] sm:$0xf]
    %v141 = vld [vmem:[%s129 + $0x2c] sm:$0xf]
    %v142 = vld [vmem:[%s129 + $0x30] sm:$0xf]
    %v143 = vld [vmem:[%s129 + $0x34] sm:$0xf]
    %v144 = vld [vmem:[%s129 + $0x38] sm:$0xf]
    %v145 = vld [vmem:[%s129 + $0x3c] sm:$0xf]
    %v162 = vunpack.c.l.b16 %v130
    %v163 = vunpack.c.l.b16 %v131
    %v164 = vunpack.c.l.b16 %v132
    %v165 = vunpack.c.l.b16 %v133
    %v166 = vunpack.c.l.b16 %v134
    %v167 = vunpack.c.l.b16 %v135
    %v168 = vunpack.c.l.b16 %v136
    %v169 = vunpack.c.l.b16 %v137
    %v170 = vunpack.c.l.b16 %v138
    %v171 = vunpack.c.l.b16 %v139
    %v172 = vunpack.c.l.b16 %v140
    %v173 = vunpack.c.l.b16 %v141
    %v174 = vunpack.c.l.b16 %v142
    %v175 = vunpack.c.l.b16 %v143
    %v176 = vunpack.c.l.b16 %v144
    %v177 = vunpack.c.l.b16 %v145
    %v178 = vpack.c.b16 %v163, %v162
    %v179 = vpack.c.b16 %v165, %v164
    %v180 = vpack.c.b16 %v167, %v166
    %v181 = vpack.c.b16 %v169, %v168
    %v182 = vpack.c.b16 %v171, %v170
    %v183 = vpack.c.b16 %v173, %v172
    %v184 = vpack.c.b16 %v175, %v174
    %v185 = vpack.c.b16 %v177, %v176
    %194 = vmatpush.bf16.msra.mxu0 %v185
    %195 = vmatpush.bf16.msra.mxu0 %v184
    %196 = vmatpush.bf16.msra.mxu0 %v183
    %197 = vmatpush.bf16.msra.mxu0 %v182
    %198 = vmatpush.bf16.msra.mxu0 %v181
    %199 = vmatpush.bf16.msra.mxu0 %v180
    %200 = vmatpush.bf16.msra.mxu0 %v179
    %201 = vmatpush.bf16.msra.mxu0 %v178
    %202 = vmatmul.bf16.gmra.mxu0 %v39
    %v203 = vpop.f32.mrf.mxu0
    %v204 = vadd.f32 0.0, %v203
    %v205 = vpop.f32.mrf.mxu0
    %v206 = vadd.f32 0.0, %v205
    %207 = vmatmul.bf16.gmra.mxu0 %v40
    %v208 = vpop.f32.mrf.mxu0
    %v209 = vadd.f32 0.0, %v208
    %v210 = vpop.f32.mrf.mxu0
    %211 = vdwg.mxu0
    %v212 = vmax.f32 %v204, 0.0
    %v213 = vmax.f32 %v206, 0.0
    %v214 = vmax.f32 %v209, 0.0
    %s215 = scalar_lea.vmem %s3, 24
    %216 = vst.msk [vmem:[%s215] sm:$0xff] %vm112, %v212
    %217 = vst.msk [vmem:[%s215 + $0x8] sm:$0xff] %vm112, %v213
    %218 = vst.msk [vmem:[%s215 + $0x10] sm:$0xf] %vm115, %v214
    %v219 = vsel %vm112, %v204, 0.0
    %220 = vadd.xlane.f32.xlu0 %v219
    %v221 = vpop.xlane.xlu0 %220
    %v222 = vsel %vm112, %v206, 0.0
    %223 = vadd.xlane.f32.xlu0 %v222
    %v224 = vpop.xlane.xlu0 %223
    %v225 = vsel %vm115, %v209, 0.0
    %226 = vadd.xlane.f32.xlu0 %v225
    %v227 = vpop.xlane.xlu0 %226
    %v228 = vmul.f32 %v221, 0.0625
    %v229 = vmul.f32 %v224, 0.0625
    %v230 = vmul.f32 %v227, 0.0625
    %v234 = vlaneseq
    %v235 = vand.u32 %v234, 127
    %v236 = vperm.slane %v126, %v235
    %v237 = vadd.s32 %v235, 4294967288
    %v238 = vperm.slane %v127, %v237
    %vm239 = vcmask 130112
    %v240 = vsel %vm239, %v238, %v236
    %v241 = vadd.s32 %v235, 4294967280
    %v242 = vperm.slane %v128, %v241
    %vm243 = vcmask 195712
    %v244 = vsel %vm243, %v242, %v240
    %v249 = vperm.slane %v228, %v235
    %v250 = vperm.slane %v229, %v237
    %v251 = vsel %vm239, %v250, %v249
    %v252 = vperm.slane %v230, %v241
    %v253 = vsel %vm243, %v252, %v251
    %vm255 = vcmask 1040384
    %v256 = vsel %vm255, %v244, %v253
    %vm257 = vcmask 156672
    %258 = vst.msk [vmem:[#allocation2] sm:$0x3] %vm257, %v256
    // Predicated region
    $region10: #{tpu_custom_call.1} parent=1 // pred_check
      _
    $region11: #{tpu_custom_call.1} parent=1 // pred_check_branch
      %260 = sbr.rel (0) target = $region13
    $region12: #{tpu_custom_call.1} parent=1 // pred_region
      %262 = vsyncadd [#allocation3], 0
      %s264 = sshll.u32 [#allocation2], 4
      %s265 = int_to_ptr.vmem [resolvable:$true] %s264
      %s266 = sshll.u32 %s2, 4
      %s267 = int_to_ptr.hbm [resolvable:$true] %s266
      %269 = dma.vmem_to_hbm [thread:$0]  %s265, 32, %s267, [#allocation3]
    $region13: #{tpu_custom_call.1} parent=1 // pred_fallthru
      _
    // Predicated region
    $region14: #{tpu_custom_call.1} parent=1 // pred_check
      _
    $region15: #{tpu_custom_call.1} parent=1 // pred_check_branch
      %271 = sbr.rel (0) target = $region17
    $region16: #{tpu_custom_call.1} parent=1 // pred_region
      _
    $region17: #{tpu_custom_call.1} parent=1 // pred_fallthru
      _
    // Predicated region
    $region18: #{tpu_custom_call.1} parent=1 // pred_check
      _
    $region19: #{tpu_custom_call.1} parent=1 // pred_check_branch
      %273 = sbr.rel (0) target = $region21
    $region20: #{tpu_custom_call.1} parent=1 // pred_region
      %275 = dma.done [#allocation3], 32
    $region21: #{tpu_custom_call.1} parent=1 // pred_fallthru
      _
    // Predicated region
    $region22: #{tpu_custom_call.1} parent=1 // pred_check
      _
    $region23: #{tpu_custom_call.1} parent=1 // pred_check_branch
      %277 = sbr.rel (0) target = $region25
    $region24: #{tpu_custom_call.1} parent=1 // pred_region
      _
    $region25: #{tpu_custom_call.1} parent=1 // pred_fallthru
      _
    %278 = vsyncpa [#allocation3], 1

</llo_original>
